<compile_context>
chip_gen: v7x
topology: tpu7x:2x2x1
jax: 0.10.0
libtpu: 0.0.40
codegen_flags: <defaults>
</compile_context>

<pallas_src>
import jax
import jax.numpy as jnp
import numpy as np
from jax.experimental import pallas as pl
from jax.experimental.pallas import tpu as pltpu

# Pad fill for logits: sigmoid(-1e4) == 0 and the BCE term is exactly 0 in
# f32 (exp(-1e4) underflows), so padded elements never need masking.
_NEG_FILL = -1.0e4


def _loss_kernel(x_ref, y_ref, acc_ref):
    """Accumulate partial sums for tp, sum_p, sum_y and BCE.

    x_ref, y_ref : (1, C, cpt, rc, 128) logits / targets for this grid step
                   (cpt row-chunks of rc rows x 128 lanes per channel).
    acc_ref      : (1, 4*C, 8, 128) f32 accumulator slab, resident across the
                   reduction grid axis. Layout along axis 1 is
                   [tp | sum_p | sum_y | bce], each C channels wide.
    """
    @pl.when(pl.program_id(2) == 0)
    def _():
        acc_ref[...] = jnp.zeros_like(acc_ref)

    C = x_ref.shape[1]
    cpt = x_ref.shape[2]          # chunks per tile
    rc = x_ref.shape[3]           # rows per chunk (multiple of 8)

    def body(i, carry):
        x = x_ref[0, :, i, :, :].astype(jnp.float32)   # (C, rc, 128)
        y = y_ref[0, :, i, :, :].astype(jnp.float32)

        # One EUP exp shared by sigmoid and the BCE softplus term.
        e = jnp.exp(-jnp.abs(x))
        denom = 1.0 + e
        inv = 1.0 / denom
        p = jnp.where(x >= 0.0, inv, e * inv)           # == sigmoid(x)
        # Stable BCE-with-logits: max(x,0) - x*y + log(1+exp(-|x|)).
        # TODO(synk): jnp.log(denom) drops the log1p guard for huge |x|; the
        # per-element error is ~exp(-|x|) and is negligible in the mean.
        bce = jnp.maximum(x, 0.0) - x * y + jnp.log(denom)

        def red(v):  # (C, rc, 128) -> (C, 8, 128); pure vreg-wise VPU adds.
            return v.reshape(C, rc // 8, 8, 128).sum(axis=1)

        acc_ref[0, 0 * C:1 * C] += red(p * y)   # tp
        acc_ref[0, 1 * C:2 * C] += red(p)       # sum p
        acc_ref[0, 2 * C:3 * C] += red(y)       # sum y
        acc_ref[0, 3 * C:4 * C] += red(bce)     # bce sum
        return carry

    jax.lax.fori_loop(0, cpt, body, 0)


def tversky_and_bce_loss(net_output, target, *,
                         weight_ce: float = 1.0,
                         weight_dice: float = 1.0,
                         smooth: float = 1e-5,
                         alpha: float = 0.3,
                         beta: float = 0.7,
                         do_bg: bool = True,
                         block_bytes: int = 8 * 1024 * 1024):
    """net_output, target: (B, C, *spatial) arrays.

    Inputs may be bf16 / fp16 logits and bool / int8 targets; they are read in
    their storage dtype (halving / quartering the HBM stream) and cast to f32
    inside the kernel.
    """
    assert net_output.shape == target.shape
    shape = net_output.shape
    B, C = int(shape[0]), int(shape[1])
    n = int(np.prod(shape[2:])) if len(shape) > 2 else 1

    x = net_output.reshape(B, C, n)
    y = target.reshape(B, C, n)

    # ---- tile geometry ----------------------------------------------------
    # Rows (of 128 lanes) per grid step, sized from a VMEM budget so that the
    # double-buffered (x + y) blocks stay ~2 * block_bytes total.
    bytes_per_row = C * 128 * (x.dtype.itemsize + y.dtype.itemsize)
    r_max = max(8, min(2048, (block_bytes // bytes_per_row) // 8 * 8))

    n128 = pl.cdiv(n, 128)            # rows of 128 lanes
    n128 = pl.cdiv(n128, 8) * 8       # multiple of 8 so tiles are (8,128)

    if n128 <= r_max:
        R = n128
    else:
        # Prefer a divisor of n128 (no row padding / extra copy); otherwise
        # pad rows up to a multiple of r_max (padding contributes zero).
        R = 0
        r_min = max(8, (r_max // 4) // 8 * 8)
        r = r_max
        while r >= r_min:
            if n128 % r == 0:
                R = r
                break
            r -= 8
        if R == 0:
            R = r_max
            n128 = pl.cdiv(n128, R) * R
    nt = n128 // R

    n_pad = n128 * 128
    if n_pad != n:
        pad = ((0, 0), (0, 0), (0, n_pad - n))
        x = jnp.pad(x, pad, constant_values=_NEG_FILL)   # sigmoid->0, bce->0
        y = jnp.pad(y, pad, constant_values=0)

    # Inner chunk rows: keep each (C, rc, 128) f32 intermediate ~<=16 vregs.
    rc = max(8, min(R, ((128 // max(1, C)) // 8) * 8))
    while rc > 8 and R % rc != 0:
        rc -= 8
    cpt = R // rc                      # chunks per grid step
    nch = n128 // rc                   # total chunks per (b, c)

    x = x.reshape(B, C, nch, rc, 128)
    y = y.reshape(B, C, nch, rc, 128)

    # v7x: if the batch axis does not give 2-TensorCore parallelism, split the
    # reduction tiles across a second "parallel" grid axis (separate slabs).
    n_par = 2 if (B == 1 and nt >= 2 and nt % 2 == 0) else 1
    nt_inner = nt // n_par

    acc_shape = jax.ShapeDtypeStruct((B * n_par, 4 * C, 8, 128), jnp.float32)
    in_specs = [
        pl.BlockSpec((1, C, cpt, rc, 128),
                     lambda b, g, t: (b, 0, g * nt_inner + t, 0, 0)),
        pl.BlockSpec((1, C, cpt, rc, 128),
                     lambda b, g, t: (b, 0, g * nt_inner + t, 0, 0)),
    ]
    out_specs = pl.BlockSpec((1, 4 * C, 8, 128),
                             lambda b, g, t: (b * n_par + g, 0, 0, 0))

    x_blk = C * R * 128 * x.dtype.itemsize
    y_blk = C * R * 128 * y.dtype.itemsize
    out_blk = 4 * C * 8 * 128 * 4
    vmem_need = 2 * (x_blk + y_blk) + 2 * out_blk + (1 << 20)
    vmem_limit = int(min(64 * 1024 * 1024,
                         max(32 * 1024 * 1024, 2 * vmem_need)))

    acc = pl.pallas_call(
        _loss_kernel,
        out_shape=acc_shape,
        grid_spec=pltpu.PrefetchScalarGridSpec(
            num_scalar_prefetch=0,
            grid=(B, n_par, nt_inner),
            in_specs=in_specs,
            out_specs=out_specs,
        ),
        compiler_params=pltpu.CompilerParams(
            dimension_semantics=("parallel", "parallel", "arbitrary"),
            vmem_limit_bytes=vmem_limit),
    )(x, y)

    # ---- tiny final collapse (XLA) -----------------------------------------
    sums = jnp.sum(acc.reshape(B * n_par, 4, C, 8, 128), axis=(0, 3, 4))  # (4,C)
    tp, sum_p, sum_y = sums[0], sums[1], sums[2]
    bce_sum = jnp.sum(sums[3])
    fp = sum_p - tp          # exact identity: sum p*(1-y)
    fn = sum_y - tp          # exact identity: sum (1-p)*y

    tversky = (tp + smooth) / (tp + alpha * fp + beta * fn + smooth)
    if not do_bg:
        tversky = tversky[1:]
    dc_loss = -jnp.mean(tversky)

    ce_loss = bce_sum / (B * C * n)      # BCEWithLogitsLoss(reduction='mean')

    return weight_ce * ce_loss + weight_dice * dc_loss


def _reference_loss(net_output, target, *, smooth=1e-5, alpha=0.3, beta=0.7,
                    weight_ce=1.0, weight_dice=1.0):
    """Pure-JAX reference mirroring the PyTorch module (mask=None path)."""
    x = net_output.astype(jnp.float32)
    y = target.astype(jnp.float32)
    p = jax.nn.sigmoid(x)
    axes = tuple([0] + list(range(2, x.ndim)))  # batch_dice=True
    tp = jnp.sum(p * y, axes)
    fp = jnp.sum(p * (1 - y), axes)
    fn = jnp.sum((1 - p) * y, axes)
    tversky = (tp + smooth) / (tp + alpha * fp + beta * fn + smooth)
    dc = -jnp.mean(tversky)
    bce = jnp.mean(jnp.maximum(x, 0.0) - x * y + jnp.log1p(jnp.exp(-jnp.abs(x))))
    return weight_ce * bce + weight_dice * dc


if __name__ == "__main__":
    key = jax.random.PRNGKey(0)
    k1, k2, k3, k4, k5, k6 = jax.random.split(key, 6)

    # Case 1: small 2-D input, lane-padded path (n = 256).
    B, C, H, W = 2, 4, 16, 16
    x1 = jax.random.normal(k1, (B, C, H, W), dtype=jnp.float32)
    y1 = (jax.random.uniform(k2, (B, C, H, W)) > 0.5).astype(jnp.float32)
    l1 = jax.block_until_ready(tversky_and_bce_loss(x1, y1))
    r1 = jax.block_until_ready(_reference_loss(x1, y1))
    np.testing.assert_allclose(np.asarray(l1), np.asarray(r1),
                               rtol=1e-4, atol=1e-4)

    # Case 2: 3-D ragged spatial size (pad-with-zero-contribution path).
    B2, C2, sp2 = 2, 3, (5, 7, 9)      # 315 voxels -> not a multiple of 128
    x2 = jax.random.normal(k3, (B2, C2) + sp2, dtype=jnp.float32)
    y2 = (jax.random.uniform(k4, (B2, C2) + sp2) > 0.5).astype(jnp.float32)
    l2 = jax.block_until_ready(tversky_and_bce_loss(x2, y2))
    r2 = jax.block_until_ready(_reference_loss(x2, y2))
    np.testing.assert_allclose(np.asarray(l2), np.asarray(r2),
                               rtol=1e-4, atol=1e-4)

    # Case 3: B=1, larger spatial — exercises multi-tile reduction, the
    # in-kernel chunk loop and the 2-TensorCore parallel split.
    B3, C3, sp3 = 1, 4, (64, 64, 64)
    x3 = jax.random.normal(k5, (B3, C3) + sp3, dtype=jnp.float32)
    y3 = (jax.random.uniform(k6, (B3, C3) + sp3) > 0.5).astype(jnp.float32)
    l3 = jax.block_until_ready(
        tversky_and_bce_loss(x3, y3, block_bytes=2 * 1024 * 1024))
    r3 = jax.block_until_ready(_reference_loss(x3, y3))
    np.testing.assert_allclose(np.asarray(l3), np.asarray(r3),
                               rtol=1e-4, atol=1e-4)

    print("KERNEL_OK")
</pallas_src>

<mosaic_0001>
module attributes {stable_mosaic.version = 11 : i64} {
  func.func @_loss_kernel(%arg0: i32, %arg1: i32, %arg2: i32, %arg3: memref<1x4x1x8x128xf32, #tpu.memory_space<vmem>>, %arg4: memref<1x4x1x8x128xf32, #tpu.memory_space<vmem>>, %arg5: memref<1x16x8x128xf32, #tpu.memory_space<vmem>>) attributes {dimension_semantics = [#tpu.dimension_semantics<parallel>, #tpu.dimension_semantics<parallel>, #tpu.dimension_semantics<arbitrary>], iteration_bounds = array<i64: 2, 1, 1>, scalar_prefetch = 0 : i64, scratch_operands = 0 : i64, tpu.core_type = #tpu.core_type<tc>, window_params = [{transform_indices = @transform_0, window_bounds = array<i64: 1, 4, 1, 8, 128>}, {transform_indices = @transform_1, window_bounds = array<i64: 1, 4, 1, 8, 128>}, {transform_indices = @transform_2, window_bounds = array<i64: 1, 16, 8, 128>}]} {
    %c0_i32 = arith.constant 0 : i32
    %0 = arith.cmpi eq, %arg2, %c0_i32 : i32
    %1 = arith.extui %0 : i1 to i32
    %c0_i32_0 = arith.constant 0 : i32
    %2 = arith.cmpi ne, %1, %c0_i32_0 : i32
    scf.if %2 {
      %cst_46 = arith.constant 0.000000e+00 : f32
      %60 = vector.broadcast %cst_46 : f32 to vector<1x16x8x128xf32>
      %c0_47 = arith.constant 0 : index
      %c0_48 = arith.constant 0 : index
      %c0_49 = arith.constant 0 : index
      %c0_50 = arith.constant 0 : index
      %61 = vector.load %arg5[%c0_47, %c0_48, %c0_49, %c0_50] : memref<1x16x8x128xf32, #tpu.memory_space<vmem>>, vector<1x16x8x128xf32>
      tpu.vector_store %arg5[%c0_47, %c0_48, %c0_49, %c0_50], %60 {strides = array<i32>} : memref<1x16x8x128xf32, #tpu.memory_space<vmem>>, vector<1x16x8x128xf32>,
    } else {
    }
    %c0_i32_1 = arith.constant 0 : i32
    %c0 = arith.constant 0 : index
    %c0_2 = arith.constant 0 : index
    %3 = arith.index_cast %c0_i32_1 : i32 to index
    %c0_3 = arith.constant 0 : index
    %c0_4 = arith.constant 0 : index
    %4 = vector.load %arg3[%c0, %c0_2, %3, %c0_3, %c0_4] : memref<1x4x1x8x128xf32, #tpu.memory_space<vmem>>, vector<1x4x1x8x128xf32>
    %5 = vector.shape_cast %4 : vector<1x4x1x8x128xf32> to vector<4x8x128xf32>
    %c0_5 = arith.constant 0 : index
    %c0_6 = arith.constant 0 : index
    %6 = arith.index_cast %c0_i32_1 : i32 to index
    %c0_7 = arith.constant 0 : index
    %c0_8 = arith.constant 0 : index
    %7 = vector.load %arg4[%c0_5, %c0_6, %6, %c0_7, %c0_8] : memref<1x4x1x8x128xf32, #tpu.memory_space<vmem>>, vector<1x4x1x8x128xf32>
    %8 = vector.shape_cast %7 : vector<1x4x1x8x128xf32> to vector<4x8x128xf32>
    %9 = math.absf %5 : vector<4x8x128xf32>
    %cst = arith.constant 0.000000e+00 : f32
    %10 = vector.broadcast %cst : f32 to vector<4x8x128xf32>
    %11 = arith.subf %10, %9 : vector<4x8x128xf32>
    %12 = math.exp %11 : vector<4x8x128xf32>
    %cst_9 = arith.constant 1.000000e+00 : f32
    %13 = vector.broadcast %cst_9 : f32 to vector<4x8x128xf32>
    %14 = arith.addf %13, %12 : vector<4x8x128xf32>
    %cst_10 = arith.constant 1.000000e+00 : f32
    %15 = vector.broadcast %cst_10 : f32 to vector<4x8x128xf32>
    %16 = arith.divf %15, %14 : vector<4x8x128xf32>
    %cst_11 = arith.constant 0.000000e+00 : f32
    %17 = vector.broadcast %cst_11 : f32 to vector<4x8x128xf32>
    %18 = arith.cmpf oge, %5, %17 : vector<4x8x128xf32>
    %19 = arith.mulf %12, %16 : vector<4x8x128xf32>
    %20 = arith.select %18, %16, %19 : vector<4x8x128xi1>, vector<4x8x128xf32>
    %cst_12 = arith.constant 0.000000e+00 : f32
    %21 = vector.broadcast %cst_12 : f32 to vector<4x8x128xf32>
    %22 = arith.maximumf %5, %21 : vector<4x8x128xf32>
    %23 = arith.mulf %5, %8 : vector<4x8x128xf32>
    %24 = arith.subf %22, %23 : vector<4x8x128xf32>
    %25 = math.log %14 : vector<4x8x128xf32>
    %26 = arith.addf %24, %25 : vector<4x8x128xf32>
    %c0_13 = arith.constant 0 : index
    %c0_14 = arith.constant 0 : index
    %c0_15 = arith.constant 0 : index
    %c0_16 = arith.constant 0 : index
    %27 = vector.load %arg5[%c0_13, %c0_14, %c0_15, %c0_16] : memref<1x16x8x128xf32, #tpu.memory_space<vmem>>, vector<1x4x8x128xf32>
    %28 = vector.shape_cast %27 : vector<1x4x8x128xf32> to vector<4x8x128xf32>
    %29 = arith.mulf %20, %8 : vector<4x8x128xf32>
    %30 = vector.shape_cast %29 : vector<4x8x128xf32> to vector<4x1x8x128xf32>
    %cst_17 = arith.constant dense<0.000000e+00> : vector<4x8x128xf32>
    %31 = vector.multi_reduction <add>, %30, %cst_17 [1] : vector<4x1x8x128xf32> to vector<4x8x128xf32>
    %32 = arith.addf %28, %31 : vector<4x8x128xf32>
    %c0_18 = arith.constant 0 : index
    %c0_19 = arith.constant 0 : index
    %c0_20 = arith.constant 0 : index
    %c0_21 = arith.constant 0 : index
    %33 = vector.load %arg5[%c0_18, %c0_19, %c0_20, %c0_21] : memref<1x16x8x128xf32, #tpu.memory_space<vmem>>, vector<1x4x8x128xf32>
    %34 = vector.shape_cast %33 : vector<1x4x8x128xf32> to vector<4x8x128xf32>
    %35 = vector.shape_cast %32 : vector<4x8x128xf32> to vector<1x4x8x128xf32>
    tpu.vector_store %arg5[%c0_18, %c0_19, %c0_20, %c0_21], %35 {strides = array<i32>} : memref<1x16x8x128xf32, #tpu.memory_space<vmem>>, vector<1x4x8x128xf32>,
    %c0_22 = arith.constant 0 : index
    %c4 = arith.constant 4 : index
    %c0_23 = arith.constant 0 : index
    %c0_24 = arith.constant 0 : index
    %36 = vector.load %arg5[%c0_22, %c4, %c0_23, %c0_24] : memref<1x16x8x128xf32, #tpu.memory_space<vmem>>, vector<1x4x8x128xf32>
    %37 = vector.shape_cast %36 : vector<1x4x8x128xf32> to vector<4x8x128xf32>
    %38 = vector.shape_cast %20 : vector<4x8x128xf32> to vector<4x1x8x128xf32>
    %cst_25 = arith.constant dense<0.000000e+00> : vector<4x8x128xf32>
    %39 = vector.multi_reduction <add>, %38, %cst_25 [1] : vector<4x1x8x128xf32> to vector<4x8x128xf32>
    %40 = arith.addf %37, %39 : vector<4x8x128xf32>
    %c0_26 = arith.constant 0 : index
    %c4_27 = arith.constant 4 : index
    %c0_28 = arith.constant 0 : index
    %c0_29 = arith.constant 0 : index
    %41 = vector.load %arg5[%c0_26, %c4_27, %c0_28, %c0_29] : memref<1x16x8x128xf32, #tpu.memory_space<vmem>>, vector<1x4x8x128xf32>
    %42 = vector.shape_cast %41 : vector<1x4x8x128xf32> to vector<4x8x128xf32>
    %43 = vector.shape_cast %40 : vector<4x8x128xf32> to vector<1x4x8x128xf32>
    tpu.vector_store %arg5[%c0_26, %c4_27, %c0_28, %c0_29], %43 {strides = array<i32>} : memref<1x16x8x128xf32, #tpu.memory_space<vmem>>, vector<1x4x8x128xf32>,
    %c0_30 = arith.constant 0 : index
    %c8 = arith.constant 8 : index
    %c0_31 = arith.constant 0 : index
    %c0_32 = arith.constant 0 : index
    %44 = vector.load %arg5[%c0_30, %c8, %c0_31, %c0_32] : memref<1x16x8x128xf32, #tpu.memory_space<vmem>>, vector<1x4x8x128xf32>
    %45 = vector.shape_cast %44 : vector<1x4x8x128xf32> to vector<4x8x128xf32>
    %46 = vector.shape_cast %8 : vector<4x8x128xf32> to vector<4x1x8x128xf32>
    %cst_33 = arith.constant dense<0.000000e+00> : vector<4x8x128xf32>
    %47 = vector.multi_reduction <add>, %46, %cst_33 [1] : vector<4x1x8x128xf32> to vector<4x8x128xf32>
    %48 = arith.addf %45, %47 : vector<4x8x128xf32>
    %c0_34 = arith.constant 0 : index
    %c8_35 = arith.constant 8 : index
    %c0_36 = arith.constant 0 : index
    %c0_37 = arith.constant 0 : index
    %49 = vector.load %arg5[%c0_34, %c8_35, %c0_36, %c0_37] : memref<1x16x8x128xf32, #tpu.memory_space<vmem>>, vector<1x4x8x128xf32>
    %50 = vector.shape_cast %49 : vector<1x4x8x128xf32> to vector<4x8x128xf32>
    %51 = vector.shape_cast %48 : vector<4x8x128xf32> to vector<1x4x8x128xf32>
    tpu.vector_store %arg5[%c0_34, %c8_35, %c0_36, %c0_37], %51 {strides = array<i32>} : memref<1x16x8x128xf32, #tpu.memory_space<vmem>>, vector<1x4x8x128xf32>,
    %c0_38 = arith.constant 0 : index
    %c12 = arith.constant 12 : index
    %c0_39 = arith.constant 0 : index
    %c0_40 = arith.constant 0 : index
    %52 = vector.load %arg5[%c0_38, %c12, %c0_39, %c0_40] : memref<1x16x8x128xf32, #tpu.memory_space<vmem>>, vector<1x4x8x128xf32>
    %53 = vector.shape_cast %52 : vector<1x4x8x128xf32> to vector<4x8x128xf32>
    %54 = vector.shape_cast %26 : vector<4x8x128xf32> to vector<4x1x8x128xf32>
    %cst_41 = arith.constant dense<0.000000e+00> : vector<4x8x128xf32>
    %55 = vector.multi_reduction <add>, %54, %cst_41 [1] : vector<4x1x8x128xf32> to vector<4x8x128xf32>
    %56 = arith.addf %53, %55 : vector<4x8x128xf32>
    %c0_42 = arith.constant 0 : index
    %c12_43 = arith.constant 12 : index
    %c0_44 = arith.constant 0 : index
    %c0_45 = arith.constant 0 : index
    %57 = vector.load %arg5[%c0_42, %c12_43, %c0_44, %c0_45] : memref<1x16x8x128xf32, #tpu.memory_space<vmem>>, vector<1x4x8x128xf32>
    %58 = vector.shape_cast %57 : vector<1x4x8x128xf32> to vector<4x8x128xf32>
    %59 = vector.shape_cast %56 : vector<4x8x128xf32> to vector<1x4x8x128xf32>
    tpu.vector_store %arg5[%c0_42, %c12_43, %c0_44, %c0_45], %59 {strides = array<i32>} : memref<1x16x8x128xf32, #tpu.memory_space<vmem>>, vector<1x4x8x128xf32>,
    %c1_i32 = arith.constant 1 : i32
    return
  }
  func.func @transform_0(%arg0: i32, %arg1: i32, %arg2: i32) -> (i32, i32, i32, i32, i32) {
    %c1_i32 = arith.constant 1 : i32
    %0 = arith.muli %arg1, %c1_i32 : i32
    %1 = arith.addi %0, %arg2 : i32
    %c0_i32 = arith.constant 0 : i32
    %c0_i32_0 = arith.constant 0 : i32
    %c0_i32_1 = arith.constant 0 : i32
    %c0_i32_2 = arith.constant 0 : i32
    return %arg0, %c0_i32, %1, %c0_i32_0, %c0_i32_1 : i32, i32, i32, i32, i32
  }
  func.func @transform_1(%arg0: i32, %arg1: i32, %arg2: i32) -> (i32, i32, i32, i32, i32) {
    %c1_i32 = arith.constant 1 : i32
    %0 = arith.muli %arg1, %c1_i32 : i32
    %1 = arith.addi %0, %arg2 : i32
    %c0_i32 = arith.constant 0 : i32
    %c0_i32_0 = arith.constant 0 : i32
    %c0_i32_1 = arith.constant 0 : i32
    %c0_i32_2 = arith.constant 0 : i32
    return %arg0, %c0_i32, %1, %c0_i32_0, %c0_i32_1 : i32, i32, i32, i32, i32
  }
  func.func @transform_2(%arg0: i32, %arg1: i32, %arg2: i32) -> (i32, i32, i32, i32) {
    %c1_i32 = arith.constant 1 : i32
    %0 = arith.muli %arg0, %c1_i32 : i32
    %1 = arith.addi %0, %arg1 : i32
    %c0_i32 = arith.constant 0 : i32
    %c0_i32_0 = arith.constant 0 : i32
    %c0_i32_1 = arith.constant 0 : i32
    %c0_i32_2 = arith.constant 0 : i32
    return %1, %c0_i32, %c0_i32_0, %c0_i32_1 : i32, i32, i32, i32
  }
}

</mosaic_0001>

<llo_original>
// kernel: tpu_custom_call.1
$region0: #{tpu_custom_call.1}
  #allocation0 [shape = 'u32[]', space=smem, size = 0x4, offset = 0x4, fixed_abs, tag = 'smem constant byte address 0x4 - core index']
  #allocation1 [shape = 'u32[144,128]{1,0:T(1,128)}', space=vmem, size = 0x12000, scoped, tag = 'internal scratch']
  %s0 = inlined_call_operand.hbm [shape: f32[2,4,1,8,128], index: 0, kind: input, shape index: {}]
  %s1 = inlined_call_operand.hbm [shape: f32[2,4,1,8,128], index: 1, kind: input, shape index: {}]
  %s2 = inlined_call_operand.hbm [shape: f32[2,16,8,128], index: 2, kind: output, shape index: {}]
  %s3 = sld [smem:[#allocation0]]
  $region53: #{tpu_custom_call.1} parent=0
    _
  %s5 = ssub.s32 1, %s3
  %s6 = scalar_select 0, %s5, %s3
  $region1: #{tpu_custom_call.1} parent=0
    #allocation2 [shape = 'u8[32768]{0}', space=vmem, size = 0x8000, scoped, tag = 'input window, operand 0']
    #allocation3 [shape = 's32[2]{0}', space=sflag, size = 0x8, scoped, tag = 'scoped memory for tpu_custom_call.1']
    #allocation4 [shape = 's32[2]{0}', space=sflag, size = 0x8, scoped, tag = 'scoped memory for tpu_custom_call.1']
    #allocation5 [shape = 'u8[32768]{0}', space=vmem, size = 0x8000, scoped, tag = 'input window, operand 1']
    #allocation6 [shape = 's32[2]{0}', space=sflag, size = 0x8, scoped, tag = 'scoped memory for tpu_custom_call.1']
    #allocation7 [shape = 'u8[131072]{0}', space=vmem, size = 0x20000, scoped, tag = 'output window, operand 0']
    %7 = vsyncpa [#allocation3], 0
    %s8 = scalar_lea.sflag [#allocation3], 1
    %9 = vsyncpa %s8, 0
    %10 = vsyncpa [#allocation6], 0
    %s11 = scalar_lea.sflag [#allocation6], 1
    %12 = vsyncpa %s11, 0
    %13 = vsyncpa [#allocation4], 0
    %s14 = scalar_lea.sflag [#allocation4], 1
    %15 = vsyncpa %s14, 0
    loop: start=0, step=1, limit=4
    $region2: #{tpu_custom_call.1} parent=1 // loop_pre_header
      _
    $region3: #{tpu_custom_call.1} parent=1 // loop_header
      %s17 = sphi 0, %s21
      %p18 = scmp.ge.s32.totalorder %s17, 4
      %s24 = sphi 0, %s43
      %s25 = sphi 0, %s39
      %s26 = sphi 0, %s35
      %s27 = sphi 0, %s24
      %s28 = sphi 0, %s25
      %s29 = sphi 0, %s26
      %s30 = sphi 0, %s27
      %s31 = sphi 0, %s28
      %s32 = sphi 0, %s29
      %s50 = sphi 0, %s52
      %s53 = sphi 0, %s50
      %s54 = sphi 0, %s53
      %s70 = sphi 0, %s54
      %s80 = sphi 0, %s82
      %s83 = sphi 0, %s80
      %s84 = sphi 0, %s83
      %s100 = sphi 0, %s84
      %s108 = sphi 0, %s110
      %s111 = sphi 0, %s108
      %s112 = sphi 0, %s111
      %s128 = sphi 0, %s112
    $region4: #{tpu_custom_call.1} parent=1 // loop_header_branch
      %20 = sbr.rel (%p18) target = $region8
    $region5: #{tpu_custom_call.1} parent=1 // loop_body
      %s22 = ssub.s32 %s17, 1
      %s23 = ssub.s32 %s17, 2
      %s33 = sadd.s32 1, %s26
      %p34 = scmp.ge.s32.totalorder %s33, 1
      %s35 = scalar_select %p34, 0, %s33
      %s36 = sadd.s32 1, %s25
      %s37 = scalar_select %p34, %s36, %s25
      %p38 = scmp.ge.s32.totalorder %s37, 1
      %s39 = scalar_select %p38, 0, %s37
      %s40 = sadd.s32 1, %s24
      %s41 = scalar_select %p38, %s40, %s24
      %p42 = scmp.ge.s32.totalorder %s41, 2
      %s43 = scalar_select %p42, 0, %s41
      %s44 = sadd.s32 %s25, %s26
      %s45 = sadd.s32 %s39, %s35
      %s46 = ssub.s32 %s24, %s43
      %s47 = ssub.s32 %s44, %s45
      %s48 = sor.u32 %s46, %s47
      %p49 = scmp.eq.s32.totalorder %s48, 0
      %s51 = sadd.s32 %s50, 1
      %s52 = scalar_select %p49, %s50, %s51
      %p55 = pneg %p49
      %p56 = scmp.eq.s32.totalorder %s17, 1
      %p57 = por %p55, %p56
      %p58 = scmp.ne.s32.totalorder %s50, %s53
      %p59 = scmp.eq.s32.totalorder %s17, 0
      %p60 = por %p58, %p59
      %p61 = scmp.ne.s32.totalorder %s50, %s53
      %p62 = scmp.eq.s32.totalorder %s22, 1
      %p63 = por %p61, %p62
      %p64 = scmp.ne.s32.totalorder %s53, %s54
      %p65 = scmp.eq.s32.totalorder %s22, 0
      %p66 = por %p64, %p65
      %p67 = scmp.ne.s32.totalorder %s53, %s54
      %p68 = scmp.eq.s32.totalorder %s23, 1
      %p69 = por %p67, %p68
      %p71 = scmp.ne.s32.totalorder %s54, %s70
      %p72 = scmp.eq.s32.totalorder %s23, 0
      %p73 = por %p71, %p72
      %s74 = sadd.s32 %s25, %s26
      %s75 = sadd.s32 %s39, %s35
      %s76 = ssub.s32 %s24, %s43
      %s77 = ssub.s32 %s74, %s75
      %s78 = sor.u32 %s76, %s77
      %p79 = scmp.eq.s32.totalorder %s78, 0
      %s81 = sadd.s32 %s80, 1
      %s82 = scalar_select %p79, %s80, %s81
      %p85 = pneg %p79
      %p86 = scmp.eq.s32.totalorder %s17, 1
      %p87 = por %p85, %p86
      %p88 = scmp.ne.s32.totalorder %s80, %s83
      %p89 = scmp.eq.s32.totalorder %s17, 0
      %p90 = por %p88, %p89
      %p91 = scmp.ne.s32.totalorder %s80, %s83
      %p92 = scmp.eq.s32.totalorder %s22, 1
      %p93 = por %p91, %p92
      %p94 = scmp.ne.s32.totalorder %s83, %s84
      %p95 = scmp.eq.s32.totalorder %s22, 0
      %p96 = por %p94, %p95
      %p97 = scmp.ne.s32.totalorder %s83, %s84
      %p98 = scmp.eq.s32.totalorder %s23, 1
      %p99 = por %p97, %p98
      %p101 = scmp.ne.s32.totalorder %s84, %s100
      %p102 = scmp.eq.s32.totalorder %s23, 0
      %p103 = por %p101, %p102
      %s104 = sadd.s32 %s24, %s25
      %s105 = sadd.s32 %s43, %s39
      %s106 = ssub.s32 %s104, %s105
      %p107 = scmp.eq.s32.totalorder %s106, 0
      %s109 = sadd.s32 %s108, 1
      %s110 = scalar_select %p107, %s108, %s109
      %p113 = pneg %p107
      %p114 = scmp.eq.s32.totalorder %s17, 1
      %p115 = por %p113, %p114
      %p116 = scmp.ne.s32.totalorder %s108, %s111
      %p117 = scmp.eq.s32.totalorder %s17, 0
      %p118 = por %p116, %p117
      %p119 = scmp.ne.s32.totalorder %s108, %s111
      %p120 = scmp.eq.s32.totalorder %s22, 1
      %p121 = por %p119, %p120
      %p122 = scmp.ne.s32.totalorder %s111, %s112
      %p123 = scmp.eq.s32.totalorder %s22, 0
      %p124 = por %p122, %p123
      %p125 = scmp.ne.s32.totalorder %s111, %s112
      %p126 = scmp.eq.s32.totalorder %s23, 1
      %p127 = por %p125, %p126
      %p129 = scmp.ne.s32.totalorder %s112, %s128
      %p130 = scmp.eq.s32.totalorder %s23, 0
      %p131 = por %p129, %p130
      %p132 = scmp.le.s32.totalorder 1, %s17
      %p133 = scmp.lt.s32.totalorder %s17, 3
      %p134 = pnand %p132, %p133
      %p135 = pneg %p134
      // Predicated region
      $region9: #{tpu_custom_call.1} parent=5 // pred_check
        _
      $region10: #{tpu_custom_call.1} parent=5 // pred_check_branch
        %137 = sbr.rel (%p134) target = $region12
      $region11: #{tpu_custom_call.1} parent=5 // pred_region
        %s138 = ssub.s32 %s17, 1
      $region12: #{tpu_custom_call.1} parent=5 // pred_fallthru
        _
      %p139 = scmp.lt.s32.totalorder %s17, 2
      // Predicated region
      $region13: #{tpu_custom_call.1} parent=5 // pred_check
        %p140 = pneg %p139
      $region14: #{tpu_custom_call.1} parent=5 // pred_check_branch
        %142 = sbr.rel (%p140) target = $region16
      $region15: #{tpu_custom_call.1} parent=5 // pred_region
        // Predicated region
        $region17: #{tpu_custom_call.1} parent=15 // pred_check
          %p143 = pneg %p60
        $region18: #{tpu_custom_call.1} parent=15 // pred_check_branch
          %145 = sbr.rel (%p143) target = $region20
        $region19: #{tpu_custom_call.1} parent=15 // pred_region
          %s146 = sand.u32 %s50, 1
          %s147 = scalar_lea.sflag [#allocation3], %s146
          %s148 = sand.u32 %s50, 1
          %s149 = smul.addr %s148, 32
          %s150 = scalar_lea.vmem [#allocation2], %s149
          %s151 = sadd.s32 %s25, %s26
          %s153 = ssub.s32 512, 512
          %154 = vsyncadd %s147, %s153
          %s155 = smul.addr %s24, 4
          %s156 = sadd.s32 %s151, %s155
          %s157 = smul.addr %s156, 128
          %s158 = scalar_lea.hbm %s0, %s157
          %s159 = sshll.u32 %s150, 4
          %s160 = int_to_ptr.vmem [resolvable:$true] %s159
          %165 = dma.hbm_to_vmem [thread:$0]  %s158, 512, %s160, %s147, 128, 128, 8
        $region20: #{tpu_custom_call.1} parent=15 // pred_fallthru
          _
        // Predicated region
        $region21: #{tpu_custom_call.1} parent=15 // pred_check
          %p166 = pneg %p90
        $region22: #{tpu_custom_call.1} parent=15 // pred_check_branch
          %168 = sbr.rel (%p166) target = $region24
        $region23: #{tpu_custom_call.1} parent=15 // pred_region
          %s169 = sand.u32 %s80, 1
          %s170 = scalar_lea.sflag [#allocation6], %s169
          %s171 = sand.u32 %s80, 1
          %s172 = smul.addr %s171, 32
          %s173 = scalar_lea.vmem [#allocation5], %s172
          %s174 = sadd.s32 %s25, %s26
          %s176 = ssub.s32 512, 512
          %177 = vsyncadd %s170, %s176
          %s178 = smul.addr %s24, 4
          %s179 = sadd.s32 %s174, %s178
          %s180 = smul.addr %s179, 128
          %s181 = scalar_lea.hbm %s1, %s180
          %s182 = sshll.u32 %s173, 4
          %s183 = int_to_ptr.vmem [resolvable:$true] %s182
          %188 = dma.hbm_to_vmem [thread:$0]  %s181, 512, %s183, %s170, 128, 128, 8
        $region24: #{tpu_custom_call.1} parent=15 // pred_fallthru
          _
      $region16: #{tpu_custom_call.1} parent=5 // pred_fallthru
        _
      %p189 = scmp.le.s32.totalorder 1, %s17
      %p190 = scmp.lt.s32.totalorder %s17, 3
      %p191 = pnand %p189, %p190
      %p192 = pneg %p191
      // Predicated region
      $region25: #{tpu_custom_call.1} parent=5 // pred_check
        _
      $region26: #{tpu_custom_call.1} parent=5 // pred_check_branch
        %194 = sbr.rel (%p191) target = $region28
      $region27: #{tpu_custom_call.1} parent=5 // pred_region
        %s195 = ssub.s32 %s17, 1
        %s196 = sand.u32 %s53, 1
        %s197 = scalar_lea.sflag [#allocation3], %s196
        %s198 = sand.u32 %s53, 1
        %s199 = smul.addr %s198, 32
        %s200 = scalar_lea.vmem [#allocation2], %s199
        // Predicated region
        $region29: #{tpu_custom_call.1} parent=27 // pred_check
          %p201 = pneg %p66
        $region30: #{tpu_custom_call.1} parent=27 // pred_check_branch
          %203 = sbr.rel (%p201) target = $region32
        $region31: #{tpu_custom_call.1} parent=27 // pred_region
          %204 = dma.done %s197, 512
        $region32: #{tpu_custom_call.1} parent=27 // pred_fallthru
          _
        %s205 = sand.u32 %s83, 1
        %s206 = scalar_lea.sflag [#allocation6], %s205
        %s207 = sand.u32 %s83, 1
        %s208 = smul.addr %s207, 32
        %s209 = scalar_lea.vmem [#allocation5], %s208
        // Predicated region
        $region33: #{tpu_custom_call.1} parent=27 // pred_check
          %p210 = pneg %p96
        $region34: #{tpu_custom_call.1} parent=27 // pred_check_branch
          %212 = sbr.rel (%p210) target = $region36
        $region35: #{tpu_custom_call.1} parent=27 // pred_region
          %213 = dma.done %s206, 512
        $region36: #{tpu_custom_call.1} parent=27 // pred_fallthru
          _
        %s214 = sand.u32 %s53, 1
        %s215 = scalar_lea.sflag [#allocation3], %s214
        %s216 = sand.u32 %s53, 1
        %s217 = smul.addr %s216, 32
        %s218 = scalar_lea.vmem [#allocation2], %s217
        %p219 = pneg %p66
        %p220 = pneg %p63
        %s221 = sand.u32 %s83, 1
        %s222 = scalar_lea.sflag [#allocation6], %s221
        %s223 = sand.u32 %s83, 1
        %s224 = smul.addr %s223, 32
        %s225 = scalar_lea.vmem [#allocation5], %s224
        %p226 = pneg %p96
        %p227 = pneg %p93
        %p228 = pneg %p124
        %p229 = pneg %p121
        %s230 = sand.u32 %s111, 1
        %s231 = scalar_lea.sflag [#allocation4], %s230
        %s232 = sand.u32 %s111, 1
        %s233 = smul.addr %s232, 128
        %s234 = scalar_lea.vmem [#allocation7], %s233
        %s235 = sadd.s32 %s28, %s29
        %s236 = sadd.s32 %s28, %s29
        %s237 = sadd.s32 %s27, %s28
        %p238 = scmp.eq.s32.totalorder %s29, 0
        // Predicated region
        $region37: #{tpu_custom_call.1} parent=27 // pred_check
          %p239 = pneg %p238
        $region38: #{tpu_custom_call.1} parent=27 // pred_check_branch
          %241 = sbr.rel (%p239) target = $region40
        $region39: #{tpu_custom_call.1} parent=27 // pred_region
          %242 = vst [vmem:[%s234] sm:$0xff] 0.0
          %243 = vst [vmem:[%s234 + $0x8] sm:$0xff] 0.0
          %244 = vst [vmem:[%s234 + $0x10] sm:$0xff] 0.0
          %245 = vst [vmem:[%s234 + $0x18] sm:$0xff] 0.0
          %246 = vst [vmem:[%s234 + $0x20] sm:$0xff] 0.0
          %247 = vst [vmem:[%s234 + $0x28] sm:$0xff] 0.0
          %248 = vst [vmem:[%s234 + $0x30] sm:$0xff] 0.0
          %249 = vst [vmem:[%s234 + $0x38] sm:$0xff] 0.0
          %250 = vst [vmem:[%s234 + $0x40] sm:$0xff] 0.0
          %251 = vst [vmem:[%s234 + $0x48] sm:$0xff] 0.0
          %252 = vst [vmem:[%s234 + $0x50] sm:$0xff] 0.0
          %253 = vst [vmem:[%s234 + $0x58] sm:$0xff] 0.0
          %254 = vst [vmem:[%s234 + $0x60] sm:$0xff] 0.0
          %255 = vst [vmem:[%s234 + $0x68] sm:$0xff] 0.0
          %256 = vst [vmem:[%s234 + $0x70] sm:$0xff] 0.0
          %257 = vst [vmem:[%s234 + $0x78] sm:$0xff] 0.0
        $region40: #{tpu_custom_call.1} parent=27 // pred_fallthru
          _
        %v258 = vld [vmem:[%s200] sm:$0xff]
        %v259 = vld [vmem:[%s200 + $0x8] sm:$0xff]
        %v260 = vld [vmem:[%s200 + $0x10] sm:$0xff]
        %v261 = vld [vmem:[%s200 + $0x18] sm:$0xff]
        %v262 = vld [vmem:[%s209] sm:$0xff]
        %v263 = vld [vmem:[%s209 + $0x8] sm:$0xff]
        %v264 = vld [vmem:[%s209 + $0x10] sm:$0xff]
        %v265 = vld [vmem:[%s209 + $0x18] sm:$0xff]
        %v266 = vand.u32 2147483647, %v258
        %v267 = vand.u32 2147483647, %v259
        %v268 = vand.u32 2147483647, %v260
        %v269 = vand.u32 2147483647, %v261
        %v270 = vsub.f32 0.0, %v266
        %v271 = vsub.f32 0.0, %v267
        %v272 = vsub.f32 0.0, %v268
        %v273 = vsub.f32 0.0, %v269
        %v274 = vmul.f32 %v270, 1.442695
        %v275 = vpow.pop %v274
        %v276 = vmul.f32 %v271, 1.442695
        %v277 = vpow.pop %v276
        %v278 = vmul.f32 %v272, 1.442695
        %v279 = vpow.pop %v278
        %v280 = vmul.f32 %v273, 1.442695
        %v281 = vpow.pop %v280
        %v282 = vadd.f32 %v275, 1.0
        %v283 = vadd.f32 %v277, 1.0
        %v284 = vadd.f32 %v279, 1.0
        %v285 = vadd.f32 %v281, 1.0
        %v286 = vrcp.pop %v282
        %v287 = vmul.f32 1.0, %v286
        %v288 = vrcp.pop %v283
        %v289 = vmul.f32 1.0, %v288
        %v290 = vrcp.pop %v284
        %v291 = vmul.f32 1.0, %v290
        %v292 = vrcp.pop %v285
        %v293 = vmul.f32 1.0, %v292
        %vm294 = vcmp.ge.f32.partialorder %v258, 0.0
        %vm295 = vcmp.ge.f32.partialorder %v259, 0.0
        %vm296 = vcmp.ge.f32.partialorder %v260, 0.0
        %vm297 = vcmp.ge.f32.partialorder %v261, 0.0
        %v298 = vmul.f32 %v275, %v287
        %v299 = vmul.f32 %v277, %v289
        %v300 = vmul.f32 %v279, %v291
        %v301 = vmul.f32 %v281, %v293
        %v302 = vsel %vm294, %v287, %v298
        %v303 = vsel %vm295, %v289, %v299
        %v304 = vsel %vm296, %v291, %v300
        %v305 = vsel %vm297, %v293, %v301
        %v306 = vmax.f32 %v258, 0.0
        %v307 = vmax.f32 %v259, 0.0
        %v308 = vmax.f32 %v260, 0.0
        %v309 = vmax.f32 %v261, 0.0
        %v310 = vmul.f32 %v258, %v262
        %v311 = vmul.f32 %v259, %v263
        %v312 = vmul.f32 %v260, %v264
        %v313 = vmul.f32 %v261, %v265
        %v314 = vsub.f32 %v306, %v310
        %v315 = vsub.f32 %v307, %v311
        %v316 = vsub.f32 %v308, %v312
        %v317 = vsub.f32 %v309, %v313
        %v318 = vlog2.pop %v282
        %v319 = vmul.f32 %v318, 0.6931472
        %v320 = vlog2.pop %v283
        %v321 = vmul.f32 %v320, 0.6931472
        %v322 = vlog2.pop %v284
        %v323 = vmul.f32 %v322, 0.6931472
        %v324 = vlog2.pop %v285
        %v325 = vmul.f32 %v324, 0.6931472
        %v326 = vadd.f32 %v314, %v319
        %v327 = vadd.f32 %v315, %v321
        %v328 = vadd.f32 %v316, %v323
        %v329 = vadd.f32 %v317, %v325
        %v330 = vld [vmem:[%s234] sm:$0xff]
        %v331 = vld [vmem:[%s234 + $0x8] sm:$0xff]
        %v332 = vld [vmem:[%s234 + $0x10] sm:$0xff]
        %v333 = vld [vmem:[%s234 + $0x18] sm:$0xff]
        %v334 = vmul.f32 %v302, %v262
        %v335 = vmul.f32 %v303, %v263
        %v336 = vmul.f32 %v304, %v264
        %v337 = vmul.f32 %v305, %v265
        %v338 = vadd.f32 %v334, 0.0
        %v339 = vadd.f32 %v335, 0.0
        %v340 = vadd.f32 %v336, 0.0
        %v341 = vadd.f32 %v337, 0.0
        %v342 = vadd.f32 %v330, %v338
        %v343 = vadd.f32 %v331, %v339
        %v344 = vadd.f32 %v332, %v340
        %v345 = vadd.f32 %v333, %v341
        %346 = vst [vmem:[%s234] sm:$0xff] %v342
        %347 = vst [vmem:[%s234 + $0x8] sm:$0xff] %v343
        %348 = vst [vmem:[%s234 + $0x10] sm:$0xff] %v344
        %349 = vst [vmem:[%s234 + $0x18] sm:$0xff] %v345
        %s350 = scalar_lea.vmem %s234, 32 [#allocation7]
        %v351 = vld [vmem:[%s350] sm:$0xff]
        %v352 = vld [vmem:[%s350 + $0x8] sm:$0xff]
        %v353 = vld [vmem:[%s350 + $0x10] sm:$0xff]
        %v354 = vld [vmem:[%s350 + $0x18] sm:$0xff]
        %v355 = vadd.f32 %v302, 0.0
        %v356 = vadd.f32 %v303, 0.0
        %v357 = vadd.f32 %v304, 0.0
        %v358 = vadd.f32 %v305, 0.0
        %v359 = vadd.f32 %v351, %v355
        %v360 = vadd.f32 %v352, %v356
        %v361 = vadd.f32 %v353, %v357
        %v362 = vadd.f32 %v354, %v358
        %363 = vst [vmem:[%s350] sm:$0xff] %v359
        %364 = vst [vmem:[%s350 + $0x8] sm:$0xff] %v360
        %365 = vst [vmem:[%s350 + $0x10] sm:$0xff] %v361
        %366 = vst [vmem:[%s350 + $0x18] sm:$0xff] %v362
        %s367 = scalar_lea.vmem %s234, 64 [#allocation7]
        %v368 = vld [vmem:[%s367] sm:$0xff]
        %v369 = vld [vmem:[%s367 + $0x8] sm:$0xff]
        %v370 = vld [vmem:[%s367 + $0x10] sm:$0xff]
        %v371 = vld [vmem:[%s367 + $0x18] sm:$0xff]
        %v372 = vadd.f32 %v262, 0.0
        %v373 = vadd.f32 %v263, 0.0
        %v374 = vadd.f32 %v264, 0.0
        %v375 = vadd.f32 %v265, 0.0
        %v376 = vadd.f32 %v368, %v372
        %v377 = vadd.f32 %v369, %v373
        %v378 = vadd.f32 %v370, %v374
        %v379 = vadd.f32 %v371, %v375
        %380 = vst [vmem:[%s367] sm:$0xff] %v376
        %381 = vst [vmem:[%s367 + $0x8] sm:$0xff] %v377
        %382 = vst [vmem:[%s367 + $0x10] sm:$0xff] %v378
        %383 = vst [vmem:[%s367 + $0x18] sm:$0xff] %v379
        %s384 = scalar_lea.vmem %s234, 96 [#allocation7]
        %v385 = vld [vmem:[%s384] sm:$0xff]
        %v386 = vld [vmem:[%s384 + $0x8] sm:$0xff]
        %v387 = vld [vmem:[%s384 + $0x10] sm:$0xff]
        %v388 = vld [vmem:[%s384 + $0x18] sm:$0xff]
        %v389 = vadd.f32 %v326, 0.0
        %v390 = vadd.f32 %v327, 0.0
        %v391 = vadd.f32 %v328, 0.0
        %v392 = vadd.f32 %v329, 0.0
        %v393 = vadd.f32 %v385, %v389
        %v394 = vadd.f32 %v386, %v390
        %v395 = vadd.f32 %v387, %v391
        %v396 = vadd.f32 %v388, %v392
        %397 = vst [vmem:[%s384] sm:$0xff] %v393
        %398 = vst [vmem:[%s384 + $0x8] sm:$0xff] %v394
        %399 = vst [vmem:[%s384 + $0x10] sm:$0xff] %v395
        %400 = vst [vmem:[%s384 + $0x18] sm:$0xff] %v396
        %s401 = sand.u32 %s111, 1
        %s402 = scalar_lea.sflag [#allocation4], %s401
        %s403 = sand.u32 %s111, 1
        %s404 = smul.addr %s403, 128
        %s405 = scalar_lea.vmem [#allocation7], %s404
        // Predicated region
        $region41: #{tpu_custom_call.1} parent=27 // pred_check
          %p406 = pneg %p121
        $region42: #{tpu_custom_call.1} parent=27 // pred_check_branch
          %408 = sbr.rel (%p406) target = $region44
        $region43: #{tpu_custom_call.1} parent=27 // pred_region
          %s409 = sadd.s32 %s27, %s28
          %s411 = ssub.s32 2048, 2048
          %412 = vsyncadd %s402, %s411
          %s413 = smul.addr %s409, 16
          %s414 = smul.addr %s413, 128
          %s415 = scalar_lea.hbm %s2, %s414
          %s416 = sshll.u32 %s405, 4
          %s417 = int_to_ptr.vmem [resolvable:$true] %s416
          %422 = dma.vmem_to_hbm [thread:$0]  %s417, 2048, %s415, %s402, 128, 128, 8
        $region44: #{tpu_custom_call.1} parent=27 // pred_fallthru
          _
      $region28: #{tpu_custom_call.1} parent=5 // pred_fallthru
        _
      %p423 = scmp.le.s32.totalorder 2, %s17
      // Predicated region
      $region45: #{tpu_custom_call.1} parent=5 // pred_check
        %p424 = pneg %p423
      $region46: #{tpu_custom_call.1} parent=5 // pred_check_branch
        %426 = sbr.rel (%p424) target = $region48
      $region47: #{tpu_custom_call.1} parent=5 // pred_region
        %s427 = ssub.s32 %s17, 2
        // Predicated region
        $region49: #{tpu_custom_call.1} parent=47 // pred_check
          %p428 = pneg %p127
        $region50: #{tpu_custom_call.1} parent=47 // pred_check_branch
          %430 = sbr.rel (%p428) target = $region52
        $region51: #{tpu_custom_call.1} parent=47 // pred_region
          %s431 = sand.u32 %s112, 1
          %s432 = scalar_lea.sflag [#allocation4], %s431
          %s433 = sand.u32 %s112, 1
          %s434 = smul.addr %s433, 128
          %s435 = scalar_lea.vmem [#allocation7], %s434
          %436 = dma.done %s432, 2048
        $region52: #{tpu_custom_call.1} parent=47 // pred_fallthru
          _
      $region48: #{tpu_custom_call.1} parent=5 // pred_fallthru
        _
    $region6: #{tpu_custom_call.1} parent=1 // loop_footer
      %s21 = sadd.s32 1, %s17
    $region7: #{tpu_custom_call.1} parent=1 // loop_footer_branch
      %16 = sbr.rel target = $region3
    $region8: #{tpu_custom_call.1} parent=1 // loop_exit
      _
    %437 = vsyncpa [#allocation3], 1
    %s438 = scalar_lea.sflag [#allocation3], 1
    %439 = vsyncpa %s438, 1
    %440 = vsyncpa [#allocation6], 1
    %s441 = scalar_lea.sflag [#allocation6], 1
    %442 = vsyncpa %s441, 1
    %443 = vsyncpa [#allocation4], 1
    %s444 = scalar_lea.sflag [#allocation4], 1
    %445 = vsyncpa %s444, 1

</llo_original>
